<compile_context>
chip_gen: v6e
topology: v6e:2x2x1
jax: 0.10.0
libtpu: 0.0.40
codegen_flags: <defaults>
</compile_context>

<pallas_src>
import functools

import jax
import jax.numpy as jnp
from jax.experimental import pallas as pl
from jax.experimental.pallas import tpu as pltpu


def _seg_head_kernel(x_ref, w_ref, b_ref, out_ref, *, c_in, c_out):
    # x_ref  : (1, c_in, tr, 128) VMEM input tile; each channel plane is a
    #          dense (sublane, lane) tile (leading-dim index => free view).
    # w_ref  : (c_in, c_out) folded conv+BN weight, SMEM (scalar reads).
    # b_ref  : (c_out,)      folded conv+BN bias,   SMEM (scalar reads).
    # out_ref: (1, tr, 128)  int32 argmax over channels (lane-dense).
    planes = [x_ref[0, k, :, :].astype(jnp.float32) for k in range(c_in)]

    def logit(c):
        # VPU broadcast-FMA chain; scalar weights come from SMEM.
        acc = planes[0] * w_ref[0, c]
        for k in range(1, c_in):
            acc = acc + planes[k] * w_ref[k, c]
        return acc + b_ref[c]

    best = logit(0)
    idx = jnp.zeros(best.shape, jnp.int32)
    for c in range(1, c_out):
        v = logit(c)
        gt = v > best                       # strict: keeps first max (torch tie-break)
        best = jnp.where(gt, v, best)
        idx = jnp.where(gt, jnp.int32(c), idx)
    out_ref[0, :, :] = idx


def seg_head_pallas(x_nchw, w, b, *, target_block_bytes=1 << 20):
    """SegHead forward (eval mode) for one input tensor.

    Args:
      x_nchw: (N, C_in, H, W) float input (PyTorch NCHW convention).
      w:      (C_in, C_out) folded 1x1-conv + BN weight.
      b:      (C_out,)      folded 1x1-conv + BN bias.
      target_block_bytes: approximate input bytes per grid step (DMA size).

    Returns:
      (N, 1, H, W) int32 argmax map (keepdim=True), matching torch.argmax(dim=1).
    """
    N, C_in, H, W = x_nchw.shape
    C_out = w.shape[1]
    P = H * W
    itemsize = jnp.dtype(x_nchw.dtype).itemsize

    # Free reshape: keep native NCHW pixel order, pixels dense on (rows, 128).
    x3 = x_nchw.reshape(N, C_in, P)
    pad = (-P) % 128
    if pad:
        # TODO(synk): mask the spatial tail inside the kernel instead of padding
        # (padding costs one extra copy of the input for odd H*W).
        x3 = jnp.pad(x3, ((0, 0), (0, 0), (0, pad)))
    Pp = P + pad
    R = Pp // 128
    x4 = x3.reshape(N, C_in, R, 128)

    # Pixel-row tile: multiple of 8 sublanes (or the full plane), sized so the
    # per-step input DMA is ~target_block_bytes (avoids per-step overhead
    # domination at small tiles).
    if R <= 8:
        tr = R
    else:
        rows_budget = max(8, target_block_bytes // (C_in * 128 * itemsize))
        tr = max(8, (min(R, rows_budget) // 8) * 8)
        # Keep a handful of grid steps so the row axis can shard across
        # TensorCores (v7x has 2 TCs); costs nothing on v5e/v6e.
        while N * pl.cdiv(R, tr) < 4 and tr > 8:
            tr = max(8, ((tr // 2) // 8) * 8)

    grid = (N, pl.cdiv(R, tr))

    in_block = C_in * tr * 128 * itemsize
    out_block = tr * 128 * 4
    # Explicit VMEM budget (double-buffered in+out, generous headroom), sized
    # to also fit v7x's 64 MiB physical VMEM.
    vmem_limit = int(min(64 * 1024 * 1024,
                         max(16 * 1024 * 1024, 4 * (in_block + out_block))))

    kernel = functools.partial(_seg_head_kernel, c_in=C_in, c_out=C_out)

    out4 = pl.pallas_call(
        kernel,
        out_shape=jax.ShapeDtypeStruct((N, R, 128), jnp.int32),
        grid_spec=pltpu.PrefetchScalarGridSpec(
            num_scalar_prefetch=0,
            grid=grid,
            in_specs=[
                pl.BlockSpec((1, C_in, tr, 128), lambda n, j: (n, 0, j, 0)),
                pl.BlockSpec(memory_space=pltpu.MemorySpace.SMEM),   # w
                pl.BlockSpec(memory_space=pltpu.MemorySpace.SMEM),   # b
            ],
            out_specs=pl.BlockSpec((1, tr, 128), lambda n, j: (n, j, 0)),
        ),
        compiler_params=pltpu.CompilerParams(
            dimension_semantics=("parallel", "parallel"),
            vmem_limit_bytes=vmem_limit,
        ),
    )(x4, w, b)

    out_flat = out4.reshape(N, Pp)
    if pad:
        out_flat = out_flat[:, :P]
    return out_flat.reshape(N, 1, H, W)


def make_seg_head_params(key, input_channels, output_channels, bn_eps=1e-5):
    """Deterministically build per-head folded (weight, bias) parameters.

    ConvModule2d(1x1 conv with bias) + BatchNorm2d (eval) folded exactly:
        y = gamma * (conv(x) + conv_bias - mean) / sqrt(var + eps) + beta
    """
    params = []
    for idx, (cin, cout) in enumerate(zip(input_channels, output_channels)):
        k = jax.random.fold_in(key, idx)
        k1, k2, k3, k4 = jax.random.split(k, 4)
        conv_w = jax.random.normal(k1, (cin, cout), jnp.float32) * 0.1
        conv_b = jax.random.normal(k2, (cout,), jnp.float32) * 0.1
        gamma = 1.0 + 0.05 * jax.random.normal(k3, (cout,), jnp.float32)
        beta = 0.05 * jax.random.normal(k4, (cout,), jnp.float32)
        running_mean = jnp.zeros((cout,), jnp.float32)
        running_var = jnp.ones((cout,), jnp.float32)

        scale = gamma / jnp.sqrt(running_var + bn_eps)          # (C_out,)
        w_folded = conv_w * scale[None, :]                      # (C_in, C_out)
        b_folded = (conv_b - running_mean) * scale + beta       # (C_out,)
        params.append((w_folded, b_folded))
    return params


def seg_head_forward(inputs, params, **kw):
    """Mirror of SegHead.forward in eval mode (list in -> list out)."""
    is_seq = isinstance(inputs, (list, tuple))
    input_list = list(inputs) if is_seq else [inputs]
    outs = [seg_head_pallas(x, w, b, **kw) for x, (w, b) in zip(input_list, params)]
    return outs if is_seq else outs[0]


def _reference(x_nchw, w, b):
    # Pure-JAX reference of the same math, with the same per-channel
    # accumulation order as the kernel (exact f32 elementwise ops).
    N, C_in, H, W = x_nchw.shape
    xf = x_nchw.reshape(N, C_in, H * W).astype(jnp.float32)
    logits = None
    for k in range(C_in):
        term = xf[:, k, :][:, None, :] * w[k, :][None, :, None]   # (N, C_out, P)
        logits = term if logits is None else logits + term
    logits = logits + b[None, :, None]
    am = jnp.argmax(logits, axis=1).astype(jnp.int32)             # (N, P)
    return am.reshape(N, 1, H, W)


if __name__ == "__main__":
    key = jax.random.PRNGKey(0)

    # Small, module-consistent shapes: batch=2, C_in=4, spatial=16x16, C_out=5.
    input_channels = [4]
    output_channels = [5]
    N, H, W = 2, 16, 16

    kx, kp = jax.random.split(key)
    x = jax.random.normal(kx, (N, input_channels[0], H, W), jnp.float32)
    params = make_seg_head_params(kp, input_channels, output_channels)

    out = seg_head_forward(x, params)
    out = jax.block_until_ready(out)

    ref = _reference(x, params[0][0], params[0][1])
    assert out.shape == (N, 1, H, W), out.shape
    assert out.dtype == jnp.int32, out.dtype
    assert bool(jnp.all(out == ref)), "Pallas output mismatch vs reference"

    print("KERNEL_OK")
</pallas_src>

<mosaic_0001>
module attributes {stable_mosaic.version = 11 : i64} {
  func.func @_seg_head_kernel(%arg0: i32, %arg1: i32, %arg2: memref<1x4x2x128xf32, #tpu.memory_space<vmem>>, %arg3: memref<4x5xf32, #tpu.memory_space<smem>>, %arg4: memref<5xf32, #tpu.memory_space<smem>>, %arg5: memref<1x2x128xi32, #tpu.memory_space<vmem>>) attributes {dimension_semantics = [#tpu.dimension_semantics<parallel>, #tpu.dimension_semantics<parallel>], iteration_bounds = array<i64: 2, 1>, scalar_prefetch = 0 : i64, scratch_operands = 0 : i64, tpu.core_type = #tpu.core_type<tc>, window_params = [{transform_indices = @transform_0, window_bounds = array<i64: 1, 4, 2, 128>}, {transform_indices = @transform_1, window_bounds = array<i64: 4, 5>}, {transform_indices = @transform_2, window_bounds = array<i64: 5>}, {transform_indices = @transform_3, window_bounds = array<i64: 1, 2, 128>}]} {
    %c0 = arith.constant 0 : index
    %c0_0 = arith.constant 0 : index
    %c0_1 = arith.constant 0 : index
    %c0_2 = arith.constant 0 : index
    %0 = vector.load %arg2[%c0, %c0_0, %c0_1, %c0_2] : memref<1x4x2x128xf32, #tpu.memory_space<vmem>>, vector<1x1x2x128xf32>
    %1 = vector.shape_cast %0 : vector<1x1x2x128xf32> to vector<2x128xf32>
    %c0_3 = arith.constant 0 : index
    %c1 = arith.constant 1 : index
    %c0_4 = arith.constant 0 : index
    %c0_5 = arith.constant 0 : index
    %2 = vector.load %arg2[%c0_3, %c1, %c0_4, %c0_5] : memref<1x4x2x128xf32, #tpu.memory_space<vmem>>, vector<1x1x2x128xf32>
    %3 = vector.shape_cast %2 : vector<1x1x2x128xf32> to vector<2x128xf32>
    %c0_6 = arith.constant 0 : index
    %c2 = arith.constant 2 : index
    %c0_7 = arith.constant 0 : index
    %c0_8 = arith.constant 0 : index
    %4 = vector.load %arg2[%c0_6, %c2, %c0_7, %c0_8] : memref<1x4x2x128xf32, #tpu.memory_space<vmem>>, vector<1x1x2x128xf32>
    %5 = vector.shape_cast %4 : vector<1x1x2x128xf32> to vector<2x128xf32>
    %c0_9 = arith.constant 0 : index
    %c3 = arith.constant 3 : index
    %c0_10 = arith.constant 0 : index
    %c0_11 = arith.constant 0 : index
    %6 = vector.load %arg2[%c0_9, %c3, %c0_10, %c0_11] : memref<1x4x2x128xf32, #tpu.memory_space<vmem>>, vector<1x1x2x128xf32>
    %7 = vector.shape_cast %6 : vector<1x1x2x128xf32> to vector<2x128xf32>
    %c0_12 = arith.constant 0 : index
    %c0_13 = arith.constant 0 : index
    %8 = memref.load %arg3[%c0_12, %c0_13] : memref<4x5xf32, #tpu.memory_space<smem>>
    %9 = vector.broadcast %8 : f32 to vector<2x128xf32>
    %10 = arith.mulf %1, %9 : vector<2x128xf32>
    %c1_14 = arith.constant 1 : index
    %c0_15 = arith.constant 0 : index
    %11 = memref.load %arg3[%c1_14, %c0_15] : memref<4x5xf32, #tpu.memory_space<smem>>
    %12 = vector.broadcast %11 : f32 to vector<2x128xf32>
    %13 = arith.mulf %3, %12 : vector<2x128xf32>
    %14 = arith.addf %10, %13 : vector<2x128xf32>
    %c2_16 = arith.constant 2 : index
    %c0_17 = arith.constant 0 : index
    %15 = memref.load %arg3[%c2_16, %c0_17] : memref<4x5xf32, #tpu.memory_space<smem>>
    %16 = vector.broadcast %15 : f32 to vector<2x128xf32>
    %17 = arith.mulf %5, %16 : vector<2x128xf32>
    %18 = arith.addf %14, %17 : vector<2x128xf32>
    %c3_18 = arith.constant 3 : index
    %c0_19 = arith.constant 0 : index
    %19 = memref.load %arg3[%c3_18, %c0_19] : memref<4x5xf32, #tpu.memory_space<smem>>
    %20 = vector.broadcast %19 : f32 to vector<2x128xf32>
    %21 = arith.mulf %7, %20 : vector<2x128xf32>
    %22 = arith.addf %18, %21 : vector<2x128xf32>
    %c0_20 = arith.constant 0 : index
    %23 = memref.load %arg4[%c0_20] : memref<5xf32, #tpu.memory_space<smem>>
    %24 = vector.broadcast %23 : f32 to vector<2x128xf32>
    %25 = arith.addf %22, %24 : vector<2x128xf32>
    %c0_i32 = arith.constant 0 : i32
    %26 = vector.broadcast %c0_i32 : i32 to vector<2x128xi32>
    %c0_21 = arith.constant 0 : index
    %c1_22 = arith.constant 1 : index
    %27 = memref.load %arg3[%c0_21, %c1_22] : memref<4x5xf32, #tpu.memory_space<smem>>
    %28 = vector.broadcast %27 : f32 to vector<2x128xf32>
    %29 = arith.mulf %1, %28 : vector<2x128xf32>
    %c1_23 = arith.constant 1 : index
    %c1_24 = arith.constant 1 : index
    %30 = memref.load %arg3[%c1_23, %c1_24] : memref<4x5xf32, #tpu.memory_space<smem>>
    %31 = vector.broadcast %30 : f32 to vector<2x128xf32>
    %32 = arith.mulf %3, %31 : vector<2x128xf32>
    %33 = arith.addf %29, %32 : vector<2x128xf32>
    %c2_25 = arith.constant 2 : index
    %c1_26 = arith.constant 1 : index
    %34 = memref.load %arg3[%c2_25, %c1_26] : memref<4x5xf32, #tpu.memory_space<smem>>
    %35 = vector.broadcast %34 : f32 to vector<2x128xf32>
    %36 = arith.mulf %5, %35 : vector<2x128xf32>
    %37 = arith.addf %33, %36 : vector<2x128xf32>
    %c3_27 = arith.constant 3 : index
    %c1_28 = arith.constant 1 : index
    %38 = memref.load %arg3[%c3_27, %c1_28] : memref<4x5xf32, #tpu.memory_space<smem>>
    %39 = vector.broadcast %38 : f32 to vector<2x128xf32>
    %40 = arith.mulf %7, %39 : vector<2x128xf32>
    %41 = arith.addf %37, %40 : vector<2x128xf32>
    %c1_29 = arith.constant 1 : index
    %42 = memref.load %arg4[%c1_29] : memref<5xf32, #tpu.memory_space<smem>>
    %43 = vector.broadcast %42 : f32 to vector<2x128xf32>
    %44 = arith.addf %41, %43 : vector<2x128xf32>
    %45 = arith.cmpf ogt, %44, %25 : vector<2x128xf32>
    %46 = arith.select %45, %44, %25 : vector<2x128xi1>, vector<2x128xf32>
    %c1_i32 = arith.constant 1 : i32
    %47 = vector.broadcast %c1_i32 : i32 to vector<2x128xi32>
    %48 = arith.select %45, %47, %26 : vector<2x128xi1>, vector<2x128xi32>
    %c0_30 = arith.constant 0 : index
    %c2_31 = arith.constant 2 : index
    %49 = memref.load %arg3[%c0_30, %c2_31] : memref<4x5xf32, #tpu.memory_space<smem>>
    %50 = vector.broadcast %49 : f32 to vector<2x128xf32>
    %51 = arith.mulf %1, %50 : vector<2x128xf32>
    %c1_32 = arith.constant 1 : index
    %c2_33 = arith.constant 2 : index
    %52 = memref.load %arg3[%c1_32, %c2_33] : memref<4x5xf32, #tpu.memory_space<smem>>
    %53 = vector.broadcast %52 : f32 to vector<2x128xf32>
    %54 = arith.mulf %3, %53 : vector<2x128xf32>
    %55 = arith.addf %51, %54 : vector<2x128xf32>
    %c2_34 = arith.constant 2 : index
    %c2_35 = arith.constant 2 : index
    %56 = memref.load %arg3[%c2_34, %c2_35] : memref<4x5xf32, #tpu.memory_space<smem>>
    %57 = vector.broadcast %56 : f32 to vector<2x128xf32>
    %58 = arith.mulf %5, %57 : vector<2x128xf32>
    %59 = arith.addf %55, %58 : vector<2x128xf32>
    %c3_36 = arith.constant 3 : index
    %c2_37 = arith.constant 2 : index
    %60 = memref.load %arg3[%c3_36, %c2_37] : memref<4x5xf32, #tpu.memory_space<smem>>
    %61 = vector.broadcast %60 : f32 to vector<2x128xf32>
    %62 = arith.mulf %7, %61 : vector<2x128xf32>
    %63 = arith.addf %59, %62 : vector<2x128xf32>
    %c2_38 = arith.constant 2 : index
    %64 = memref.load %arg4[%c2_38] : memref<5xf32, #tpu.memory_space<smem>>
    %65 = vector.broadcast %64 : f32 to vector<2x128xf32>
    %66 = arith.addf %63, %65 : vector<2x128xf32>
    %67 = arith.cmpf ogt, %66, %46 : vector<2x128xf32>
    %68 = arith.select %67, %66, %46 : vector<2x128xi1>, vector<2x128xf32>
    %c2_i32 = arith.constant 2 : i32
    %69 = vector.broadcast %c2_i32 : i32 to vector<2x128xi32>
    %70 = arith.select %67, %69, %48 : vector<2x128xi1>, vector<2x128xi32>
    %c0_39 = arith.constant 0 : index
    %c3_40 = arith.constant 3 : index
    %71 = memref.load %arg3[%c0_39, %c3_40] : memref<4x5xf32, #tpu.memory_space<smem>>
    %72 = vector.broadcast %71 : f32 to vector<2x128xf32>
    %73 = arith.mulf %1, %72 : vector<2x128xf32>
    %c1_41 = arith.constant 1 : index
    %c3_42 = arith.constant 3 : index
    %74 = memref.load %arg3[%c1_41, %c3_42] : memref<4x5xf32, #tpu.memory_space<smem>>
    %75 = vector.broadcast %74 : f32 to vector<2x128xf32>
    %76 = arith.mulf %3, %75 : vector<2x128xf32>
    %77 = arith.addf %73, %76 : vector<2x128xf32>
    %c2_43 = arith.constant 2 : index
    %c3_44 = arith.constant 3 : index
    %78 = memref.load %arg3[%c2_43, %c3_44] : memref<4x5xf32, #tpu.memory_space<smem>>
    %79 = vector.broadcast %78 : f32 to vector<2x128xf32>
    %80 = arith.mulf %5, %79 : vector<2x128xf32>
    %81 = arith.addf %77, %80 : vector<2x128xf32>
    %c3_45 = arith.constant 3 : index
    %c3_46 = arith.constant 3 : index
    %82 = memref.load %arg3[%c3_45, %c3_46] : memref<4x5xf32, #tpu.memory_space<smem>>
    %83 = vector.broadcast %82 : f32 to vector<2x128xf32>
    %84 = arith.mulf %7, %83 : vector<2x128xf32>
    %85 = arith.addf %81, %84 : vector<2x128xf32>
    %c3_47 = arith.constant 3 : index
    %86 = memref.load %arg4[%c3_47] : memref<5xf32, #tpu.memory_space<smem>>
    %87 = vector.broadcast %86 : f32 to vector<2x128xf32>
    %88 = arith.addf %85, %87 : vector<2x128xf32>
    %89 = arith.cmpf ogt, %88, %68 : vector<2x128xf32>
    %90 = arith.select %89, %88, %68 : vector<2x128xi1>, vector<2x128xf32>
    %c3_i32 = arith.constant 3 : i32
    %91 = vector.broadcast %c3_i32 : i32 to vector<2x128xi32>
    %92 = arith.select %89, %91, %70 : vector<2x128xi1>, vector<2x128xi32>
    %c0_48 = arith.constant 0 : index
    %c4 = arith.constant 4 : index
    %93 = memref.load %arg3[%c0_48, %c4] : memref<4x5xf32, #tpu.memory_space<smem>>
    %94 = vector.broadcast %93 : f32 to vector<2x128xf32>
    %95 = arith.mulf %1, %94 : vector<2x128xf32>
    %c1_49 = arith.constant 1 : index
    %c4_50 = arith.constant 4 : index
    %96 = memref.load %arg3[%c1_49, %c4_50] : memref<4x5xf32, #tpu.memory_space<smem>>
    %97 = vector.broadcast %96 : f32 to vector<2x128xf32>
    %98 = arith.mulf %3, %97 : vector<2x128xf32>
    %99 = arith.addf %95, %98 : vector<2x128xf32>
    %c2_51 = arith.constant 2 : index
    %c4_52 = arith.constant 4 : index
    %100 = memref.load %arg3[%c2_51, %c4_52] : memref<4x5xf32, #tpu.memory_space<smem>>
    %101 = vector.broadcast %100 : f32 to vector<2x128xf32>
    %102 = arith.mulf %5, %101 : vector<2x128xf32>
    %103 = arith.addf %99, %102 : vector<2x128xf32>
    %c3_53 = arith.constant 3 : index
    %c4_54 = arith.constant 4 : index
    %104 = memref.load %arg3[%c3_53, %c4_54] : memref<4x5xf32, #tpu.memory_space<smem>>
    %105 = vector.broadcast %104 : f32 to vector<2x128xf32>
    %106 = arith.mulf %7, %105 : vector<2x128xf32>
    %107 = arith.addf %103, %106 : vector<2x128xf32>
    %c4_55 = arith.constant 4 : index
    %108 = memref.load %arg4[%c4_55] : memref<5xf32, #tpu.memory_space<smem>>
    %109 = vector.broadcast %108 : f32 to vector<2x128xf32>
    %110 = arith.addf %107, %109 : vector<2x128xf32>
    %111 = arith.cmpf ogt, %110, %90 : vector<2x128xf32>
    %c4_i32 = arith.constant 4 : i32
    %112 = vector.broadcast %c4_i32 : i32 to vector<2x128xi32>
    %113 = arith.select %111, %112, %92 : vector<2x128xi1>, vector<2x128xi32>
    %c0_56 = arith.constant 0 : index
    %c0_57 = arith.constant 0 : index
    %c0_58 = arith.constant 0 : index
    %114 = vector.load %arg5[%c0_56, %c0_57, %c0_58] : memref<1x2x128xi32, #tpu.memory_space<vmem>>, vector<1x2x128xi32>
    %115 = vector.shape_cast %114 : vector<1x2x128xi32> to vector<2x128xi32>
    %116 = vector.shape_cast %113 : vector<2x128xi32> to vector<1x2x128xi32>
    tpu.vector_store %arg5[%c0_56, %c0_57, %c0_58], %116 {strides = array<i32>} : memref<1x2x128xi32, #tpu.memory_space<vmem>>, vector<1x2x128xi32>,
    return
  }
  func.func @transform_0(%arg0: i32, %arg1: i32) -> (i32, i32, i32, i32) {
    %c0_i32 = arith.constant 0 : i32
    %c0_i32_0 = arith.constant 0 : i32
    %c0_i32_1 = arith.constant 0 : i32
    return %arg0, %c0_i32, %arg1, %c0_i32_0 : i32, i32, i32, i32
  }
  func.func @transform_1(%arg0: i32, %arg1: i32) -> (i32, i32) {
    %c0_i32 = arith.constant 0 : i32
    %c0_i32_0 = arith.constant 0 : i32
    %c0_i32_1 = arith.constant 0 : i32
    return %c0_i32, %c0_i32_0 : i32, i32
  }
  func.func @transform_2(%arg0: i32, %arg1: i32) -> i32 {
    %c0_i32 = arith.constant 0 : i32
    %c0_i32_0 = arith.constant 0 : i32
    return %c0_i32 : i32
  }
  func.func @transform_3(%arg0: i32, %arg1: i32) -> (i32, i32, i32) {
    %c0_i32 = arith.constant 0 : i32
    %c0_i32_0 = arith.constant 0 : i32
    return %arg0, %arg1, %c0_i32 : i32, i32, i32
  }
}

</mosaic_0001>

<llo_original>
// kernel: tpu_custom_call.1
$region0: #{tpu_custom_call.1}
  #allocation0 [shape = 'u32[]', space=smem, size = 0x4, offset = 0x4, fixed_abs, tag = 'smem constant byte address 0x4 - core index']
  #allocation1 [shape = 'u32[144,128]{1,0:T(1,128)}', space=vmem, size = 0x12000, scoped, tag = 'internal scratch']
  %s0 = inlined_call_operand.hbm [shape: f32[2,4,2,128], index: 0, kind: input, shape index: {}]
  %s1 = inlined_call_operand.hbm [shape: f32[4,5], index: 1, kind: input, shape index: {}]
  %s2 = inlined_call_operand.vmem [shape: f32[5], index: 2, kind: input, shape index: {}]
  %s3 = inlined_call_operand.hbm [shape: s32[2,2,128], index: 3, kind: output, shape index: {}]
  %s4 = sld [smem:[#allocation0]]
  $region57: #{tpu_custom_call.1} parent=0
    _
  %s6 = ssub.s32 1, %s4
  %s7 = scalar_select 0, %s6, %s4
  $region1: #{tpu_custom_call.1} parent=0
    #allocation2 [shape = 'u8[8192]{0}', space=vmem, size = 0x2000, scoped, tag = 'input window, operand 0']
    #allocation3 [shape = 's32[2]{0}', space=sflag, size = 0x8, scoped, tag = 'scoped memory for tpu_custom_call.1']
    #allocation4 [shape = 's32[2]{0}', space=sflag, size = 0x8, scoped, tag = 'scoped memory for tpu_custom_call.1']
    #allocation5 [shape = 's32[2]{0}', space=sflag, size = 0x8, scoped, tag = 'scoped memory for tpu_custom_call.1']
    #allocation6 [shape = 's32[2]{0}', space=sflag, size = 0x8, scoped, tag = 'scoped memory for tpu_custom_call.1']
    #allocation7 [shape = 'u8[2048]{0}', space=smem, size = 0x800, scoped, tag = 'input window, operand 1, single buffered']
    #allocation8 [shape = 'u8[512]{0}', space=smem, size = 0x200, scoped, tag = 'input window, operand 2, single buffered']
    #allocation9 [shape = 'u8[2048]{0}', space=vmem, size = 0x800, scoped, tag = 'output window, operand 0']
    %8 = vsyncpa [#allocation3], 0
    %s9 = scalar_lea.sflag [#allocation3], 1
    %10 = vsyncpa %s9, 0
    %11 = vsyncpa [#allocation5], 0
    %12 = vsyncpa [#allocation6], 0
    %13 = vsyncpa [#allocation4], 0
    %s14 = scalar_lea.sflag [#allocation4], 1
    %15 = vsyncpa %s14, 0
    loop: start=0, step=1, limit=4
    $region2: #{tpu_custom_call.1} parent=1 // loop_pre_header
      _
    $region3: #{tpu_custom_call.1} parent=1 // loop_header
      %s17 = sphi 0, %s21
      %p18 = scmp.ge.s32.totalorder %s17, 4
      %s24 = sphi 0, %s36
      %s25 = sphi 0, %s32
      %s26 = sphi 0, %s24
      %s27 = sphi 0, %s25
      %s28 = sphi 0, %s26
      %s29 = sphi 0, %s27
      %s41 = sphi 0, %s43
      %s44 = sphi 0, %s41
      %s45 = sphi 0, %s44
      %s61 = sphi 0, %s45
      %s65 = sphi 0, %s65
      %s67 = sphi 0, %s65
      %s68 = sphi 0, %s67
      %s82 = sphi 0, %s68
      %s86 = sphi 0, %s86
      %s88 = sphi 0, %s86
      %s89 = sphi 0, %s88
      %s103 = sphi 0, %s89
      %s111 = sphi 0, %s113
      %s114 = sphi 0, %s111
      %s115 = sphi 0, %s114
      %s131 = sphi 0, %s115
    $region4: #{tpu_custom_call.1} parent=1 // loop_header_branch
      %20 = sbr.rel (%p18) target = $region8
    $region5: #{tpu_custom_call.1} parent=1 // loop_body
      %s22 = ssub.s32 %s17, 1
      %s23 = ssub.s32 %s17, 2
      %s30 = sadd.s32 1, %s25
      %p31 = scmp.ge.s32.totalorder %s30, 1
      %s32 = scalar_select %p31, 0, %s30
      %s33 = sadd.s32 1, %s24
      %s34 = scalar_select %p31, %s33, %s24
      %p35 = scmp.ge.s32.totalorder %s34, 2
      %s36 = scalar_select %p35, 0, %s34
      %s37 = ssub.s32 %s24, %s36
      %s38 = ssub.s32 %s25, %s32
      %s39 = sor.u32 %s37, %s38
      %p40 = scmp.eq.s32.totalorder %s39, 0
      %s42 = sadd.s32 %s41, 1
      %s43 = scalar_select %p40, %s41, %s42
      %p46 = pneg %p40
      %p47 = scmp.eq.s32.totalorder %s17, 1
      %p48 = por %p46, %p47
      %p49 = scmp.ne.s32.totalorder %s41, %s44
      %p50 = scmp.eq.s32.totalorder %s17, 0
      %p51 = por %p49, %p50
      %p52 = scmp.ne.s32.totalorder %s41, %s44
      %p53 = scmp.eq.s32.totalorder %s22, 1
      %p54 = por %p52, %p53
      %p55 = scmp.ne.s32.totalorder %s44, %s45
      %p56 = scmp.eq.s32.totalorder %s22, 0
      %p57 = por %p55, %p56
      %p58 = scmp.ne.s32.totalorder %s44, %s45
      %p59 = scmp.eq.s32.totalorder %s23, 1
      %p60 = por %p58, %p59
      %p62 = scmp.ne.s32.totalorder %s45, %s61
      %p63 = scmp.eq.s32.totalorder %s23, 0
      %p64 = por %p62, %p63
      %s66 = sadd.s32 %s65, 1
      %p69 = scmp.eq.s32.totalorder %s17, 1
      %p70 = scmp.ne.s32.totalorder %s65, %s67
      %p71 = scmp.eq.s32.totalorder %s17, 0
      %p72 = por %p70, %p71
      %p73 = scmp.ne.s32.totalorder %s65, %s67
      %p74 = scmp.eq.s32.totalorder %s22, 1
      %p75 = por %p73, %p74
      %p76 = scmp.ne.s32.totalorder %s67, %s68
      %p77 = scmp.eq.s32.totalorder %s22, 0
      %p78 = por %p76, %p77
      %p79 = scmp.ne.s32.totalorder %s67, %s68
      %p80 = scmp.eq.s32.totalorder %s23, 1
      %p81 = por %p79, %p80
      %p83 = scmp.ne.s32.totalorder %s68, %s82
      %p84 = scmp.eq.s32.totalorder %s23, 0
      %p85 = por %p83, %p84
      %s87 = sadd.s32 %s86, 1
      %p90 = scmp.eq.s32.totalorder %s17, 1
      %p91 = scmp.ne.s32.totalorder %s86, %s88
      %p92 = scmp.eq.s32.totalorder %s17, 0
      %p93 = por %p91, %p92
      %p94 = scmp.ne.s32.totalorder %s86, %s88
      %p95 = scmp.eq.s32.totalorder %s22, 1
      %p96 = por %p94, %p95
      %p97 = scmp.ne.s32.totalorder %s88, %s89
      %p98 = scmp.eq.s32.totalorder %s22, 0
      %p99 = por %p97, %p98
      %p100 = scmp.ne.s32.totalorder %s88, %s89
      %p101 = scmp.eq.s32.totalorder %s23, 1
      %p102 = por %p100, %p101
      %p104 = scmp.ne.s32.totalorder %s89, %s103
      %p105 = scmp.eq.s32.totalorder %s23, 0
      %p106 = por %p104, %p105
      %s107 = ssub.s32 %s24, %s36
      %s108 = ssub.s32 %s25, %s32
      %s109 = sor.u32 %s107, %s108
      %p110 = scmp.eq.s32.totalorder %s109, 0
      %s112 = sadd.s32 %s111, 1
      %s113 = scalar_select %p110, %s111, %s112
      %p116 = pneg %p110
      %p117 = scmp.eq.s32.totalorder %s17, 1
      %p118 = por %p116, %p117
      %p119 = scmp.ne.s32.totalorder %s111, %s114
      %p120 = scmp.eq.s32.totalorder %s17, 0
      %p121 = por %p119, %p120
      %p122 = scmp.ne.s32.totalorder %s111, %s114
      %p123 = scmp.eq.s32.totalorder %s22, 1
      %p124 = por %p122, %p123
      %p125 = scmp.ne.s32.totalorder %s114, %s115
      %p126 = scmp.eq.s32.totalorder %s22, 0
      %p127 = por %p125, %p126
      %p128 = scmp.ne.s32.totalorder %s114, %s115
      %p129 = scmp.eq.s32.totalorder %s23, 1
      %p130 = por %p128, %p129
      %p132 = scmp.ne.s32.totalorder %s115, %s131
      %p133 = scmp.eq.s32.totalorder %s23, 0
      %p134 = por %p132, %p133
      %p135 = scmp.le.s32.totalorder 1, %s17
      %p136 = scmp.lt.s32.totalorder %s17, 3
      %p137 = pnand %p135, %p136
      %p138 = pneg %p137
      // Predicated region
      $region9: #{tpu_custom_call.1} parent=5 // pred_check
        _
      $region10: #{tpu_custom_call.1} parent=5 // pred_check_branch
        %140 = sbr.rel (%p137) target = $region12
      $region11: #{tpu_custom_call.1} parent=5 // pred_region
        %s141 = ssub.s32 %s17, 1
        // Predicated region
        $region13: #{tpu_custom_call.1} parent=11 // pred_check
          %p142 = pneg %p78
        $region14: #{tpu_custom_call.1} parent=11 // pred_check_branch
          %144 = sbr.rel (%p142) target = $region16
        $region15: #{tpu_custom_call.1} parent=11 // pred_region
          %s146 = ssub.s32 64, 64
          %147 = vsyncadd [#allocation5], %s146
          %150 = dma.hbm_to_smem %s1, 64, [#allocation7], [#allocation5]
        $region16: #{tpu_custom_call.1} parent=11 // pred_fallthru
          _
        // Predicated region
        $region17: #{tpu_custom_call.1} parent=11 // pred_check
          %p151 = pneg %p99
        $region18: #{tpu_custom_call.1} parent=11 // pred_check_branch
          %153 = sbr.rel (%p151) target = $region20
        $region19: #{tpu_custom_call.1} parent=11 // pred_region
          %s155 = ssub.s32 16, 16
          %156 = vsyncadd [#allocation6], %s155
          %s158 = sshll.u32 %s2, 4
          %s159 = int_to_ptr.vmem [resolvable:$true] %s158
          %161 = dma.vmem_to_smem %s159, 16, [#allocation8], [#allocation6]
        $region20: #{tpu_custom_call.1} parent=11 // pred_fallthru
          _
      $region12: #{tpu_custom_call.1} parent=5 // pred_fallthru
        _
      %p162 = scmp.lt.s32.totalorder %s17, 2
      // Predicated region
      $region21: #{tpu_custom_call.1} parent=5 // pred_check
        %p163 = pneg %p162
      $region22: #{tpu_custom_call.1} parent=5 // pred_check_branch
        %165 = sbr.rel (%p163) target = $region24
      $region23: #{tpu_custom_call.1} parent=5 // pred_region
        // Predicated region
        $region25: #{tpu_custom_call.1} parent=23 // pred_check
          %p166 = pneg %p51
        $region26: #{tpu_custom_call.1} parent=23 // pred_check_branch
          %168 = sbr.rel (%p166) target = $region28
        $region27: #{tpu_custom_call.1} parent=23 // pred_region
          %s169 = sand.u32 %s41, 1
          %s170 = scalar_lea.sflag [#allocation3], %s169
          %s171 = sand.u32 %s41, 1
          %s172 = smul.addr %s171, 8
          %s173 = scalar_lea.vmem [#allocation2], %s172
          %s175 = ssub.s32 128, 128
          %176 = vsyncadd %s170, %s175
          %s177 = smul.addr %s24, 4
          %s178 = sadd.s32 %s25, %s177
          %s179 = smul.addr %s178, 32
          %s180 = scalar_lea.hbm %s0, %s179
          %s181 = sshll.u32 %s173, 4
          %s182 = int_to_ptr.vmem [resolvable:$true] %s181
          %187 = dma.hbm_to_vmem [thread:$0]  %s180, 128, %s182, %s170, 32, 32, 2
        $region28: #{tpu_custom_call.1} parent=23 // pred_fallthru
          _
      $region24: #{tpu_custom_call.1} parent=5 // pred_fallthru
        _
      %p188 = scmp.le.s32.totalorder 1, %s17
      %p189 = scmp.lt.s32.totalorder %s17, 3
      %p190 = pnand %p188, %p189
      %p191 = pneg %p190
      // Predicated region
      $region29: #{tpu_custom_call.1} parent=5 // pred_check
        _
      $region30: #{tpu_custom_call.1} parent=5 // pred_check_branch
        %193 = sbr.rel (%p190) target = $region32
      $region31: #{tpu_custom_call.1} parent=5 // pred_region
        %s194 = ssub.s32 %s17, 1
        %s195 = sand.u32 %s44, 1
        %s196 = scalar_lea.sflag [#allocation3], %s195
        %s197 = sand.u32 %s44, 1
        %s198 = smul.addr %s197, 8
        %s199 = scalar_lea.vmem [#allocation2], %s198
        // Predicated region
        $region33: #{tpu_custom_call.1} parent=31 // pred_check
          %p200 = pneg %p57
        $region34: #{tpu_custom_call.1} parent=31 // pred_check_branch
          %202 = sbr.rel (%p200) target = $region36
        $region35: #{tpu_custom_call.1} parent=31 // pred_region
          %203 = dma.done %s196, 128
        $region36: #{tpu_custom_call.1} parent=31 // pred_fallthru
          _
        // Predicated region
        $region37: #{tpu_custom_call.1} parent=31 // pred_check
          %p204 = pneg %p78
        $region38: #{tpu_custom_call.1} parent=31 // pred_check_branch
          %206 = sbr.rel (%p204) target = $region40
        $region39: #{tpu_custom_call.1} parent=31 // pred_region
          %207 = dma.done [#allocation5], 64
        $region40: #{tpu_custom_call.1} parent=31 // pred_fallthru
          _
        // Predicated region
        $region41: #{tpu_custom_call.1} parent=31 // pred_check
          %p208 = pneg %p99
        $region42: #{tpu_custom_call.1} parent=31 // pred_check_branch
          %210 = sbr.rel (%p208) target = $region44
        $region43: #{tpu_custom_call.1} parent=31 // pred_region
          %211 = dma.done [#allocation6], 16
        $region44: #{tpu_custom_call.1} parent=31 // pred_fallthru
          _
        %212 = sfence
        %s213 = sand.u32 %s44, 1
        %s214 = scalar_lea.sflag [#allocation3], %s213
        %s215 = sand.u32 %s44, 1
        %s216 = smul.addr %s215, 8
        %s217 = scalar_lea.vmem [#allocation2], %s216
        %p218 = pneg %p57
        %p219 = pneg %p54
        %p220 = pneg %p78
        %p221 = pneg %p75
        %p222 = pneg %p99
        %p223 = pneg %p96
        %p224 = pneg %p127
        %p225 = pneg %p124
        %s226 = sand.u32 %s114, 1
        %s227 = scalar_lea.sflag [#allocation4], %s226
        %s228 = sand.u32 %s114, 1
        %s229 = smul.addr %s228, 2
        %s230 = scalar_lea.vmem [#allocation9], %s229
        %v231 = vld [vmem:[%s199] sm:$0x3]
        %s232 = scalar_lea.vmem %s199, 2 [#allocation2]
        %v233 = vld [vmem:[%s232] sm:$0x3]
        %s234 = scalar_lea.vmem %s199, 4 [#allocation2]
        %v235 = vld [vmem:[%s234] sm:$0x3]
        %s236 = scalar_lea.vmem %s199, 6 [#allocation2]
        %v237 = vld [vmem:[%s236] sm:$0x3]
        %s238 = sld [smem:[#allocation7]]
        %v239 = vstv %s238
        %v240 = vmul.f32 %v231, %v239
        %s241 = sld [smem:[#allocation7 + $0x80]]
        %v242 = vstv %s241
        %v243 = vmul.f32 %v233, %v242
        %v244 = vadd.f32 %v240, %v243
        %s245 = sld [smem:[#allocation7 + $0x100]]
        %v246 = vstv %s245
        %v247 = vmul.f32 %v235, %v246
        %v248 = vadd.f32 %v244, %v247
        %s249 = sld [smem:[#allocation7 + $0x180]]
        %v250 = vstv %s249
        %v251 = vmul.f32 %v237, %v250
        %v252 = vadd.f32 %v248, %v251
        %s253 = sld [smem:[#allocation8]]
        %v254 = vstv %s253
        %v255 = vadd.f32 %v252, %v254
        %s256 = sld [smem:[#allocation7 + $0x1]]
        %v257 = vstv %s256
        %v258 = vmul.f32 %v231, %v257
        %s259 = sld [smem:[#allocation7 + $0x81]]
        %v260 = vstv %s259
        %v261 = vmul.f32 %v233, %v260
        %v262 = vadd.f32 %v258, %v261
        %s263 = sld [smem:[#allocation7 + $0x101]]
        %v264 = vstv %s263
        %v265 = vmul.f32 %v235, %v264
        %v266 = vadd.f32 %v262, %v265
        %s267 = sld [smem:[#allocation7 + $0x181]]
        %v268 = vstv %s267
        %v269 = vmul.f32 %v237, %v268
        %v270 = vadd.f32 %v266, %v269
        %s271 = sld [smem:[#allocation8 + $0x1]]
        %v272 = vstv %s271
        %v273 = vadd.f32 %v270, %v272
        %vm274 = vcmp.gt.f32.partialorder %v273, %v255
        %v275 = vsel %vm274, %v273, %v255
        %v276 = vsel %vm274, 1, 0
        %s277 = sld [smem:[#allocation7 + $0x2]]
        %v278 = vstv %s277
        %v279 = vmul.f32 %v231, %v278
        %s280 = sld [smem:[#allocation7 + $0x82]]
        %v281 = vstv %s280
        %v282 = vmul.f32 %v233, %v281
        %v283 = vadd.f32 %v279, %v282
        %s284 = sld [smem:[#allocation7 + $0x102]]
        %v285 = vstv %s284
        %v286 = vmul.f32 %v235, %v285
        %v287 = vadd.f32 %v283, %v286
        %s288 = sld [smem:[#allocation7 + $0x182]]
        %v289 = vstv %s288
        %v290 = vmul.f32 %v237, %v289
        %v291 = vadd.f32 %v287, %v290
        %s292 = sld [smem:[#allocation8 + $0x2]]
        %v293 = vstv %s292
        %v294 = vadd.f32 %v291, %v293
        %vm295 = vcmp.gt.f32.partialorder %v294, %v275
        %v296 = vsel %vm295, %v294, %v275
        %v297 = vsel %vm295, 2, %v276
        %s298 = sld [smem:[#allocation7 + $0x3]]
        %v299 = vstv %s298
        %v300 = vmul.f32 %v231, %v299
        %s301 = sld [smem:[#allocation7 + $0x83]]
        %v302 = vstv %s301
        %v303 = vmul.f32 %v233, %v302
        %v304 = vadd.f32 %v300, %v303
        %s305 = sld [smem:[#allocation7 + $0x103]]
        %v306 = vstv %s305
        %v307 = vmul.f32 %v235, %v306
        %v308 = vadd.f32 %v304, %v307
        %s309 = sld [smem:[#allocation7 + $0x183]]
        %v310 = vstv %s309
        %v311 = vmul.f32 %v237, %v310
        %v312 = vadd.f32 %v308, %v311
        %s313 = sld [smem:[#allocation8 + $0x3]]
        %v314 = vstv %s313
        %v315 = vadd.f32 %v312, %v314
        %vm316 = vcmp.gt.f32.partialorder %v315, %v296
        %v317 = vsel %vm316, %v315, %v296
        %v318 = vsel %vm316, 3, %v297
        %s319 = sld [smem:[#allocation7 + $0x4]]
        %v320 = vstv %s319
        %v321 = vmul.f32 %v231, %v320
        %s322 = sld [smem:[#allocation7 + $0x84]]
        %v323 = vstv %s322
        %v324 = vmul.f32 %v233, %v323
        %v325 = vadd.f32 %v321, %v324
        %s326 = sld [smem:[#allocation7 + $0x104]]
        %v327 = vstv %s326
        %v328 = vmul.f32 %v235, %v327
        %v329 = vadd.f32 %v325, %v328
        %s330 = sld [smem:[#allocation7 + $0x184]]
        %v331 = vstv %s330
        %v332 = vmul.f32 %v237, %v331
        %v333 = vadd.f32 %v329, %v332
        %s334 = sld [smem:[#allocation8 + $0x4]]
        %v335 = vstv %s334
        %v336 = vadd.f32 %v333, %v335
        %vm337 = vcmp.gt.f32.partialorder %v336, %v317
        %v338 = vsel %vm337, 4, %v318
        %339 = vst [vmem:[%s230] sm:$0x3] %v338
        %s340 = sand.u32 %s114, 1
        %s341 = scalar_lea.sflag [#allocation4], %s340
        %s342 = sand.u32 %s114, 1
        %s343 = smul.addr %s342, 2
        %s344 = scalar_lea.vmem [#allocation9], %s343
        // Predicated region
        $region45: #{tpu_custom_call.1} parent=31 // pred_check
          %p345 = pneg %p124
        $region46: #{tpu_custom_call.1} parent=31 // pred_check_branch
          %347 = sbr.rel (%p345) target = $region48
        $region47: #{tpu_custom_call.1} parent=31 // pred_region
          %s349 = ssub.s32 32, 32
          %350 = vsyncadd %s341, %s349
          %s351 = sadd.s32 %s27, %s26
          %s352 = smul.addr %s351, 32
          %s353 = scalar_lea.hbm %s3, %s352
          %s355 = sshll.u32 %s344, 4
          %s356 = int_to_ptr.vmem [resolvable:$true] %s355
          %358 = dma.vmem_to_hbm [thread:$0]  %s356, 32, %s353, %s341
        $region48: #{tpu_custom_call.1} parent=31 // pred_fallthru
          _
      $region32: #{tpu_custom_call.1} parent=5 // pred_fallthru
        _
      %p359 = scmp.le.s32.totalorder 2, %s17
      // Predicated region
      $region49: #{tpu_custom_call.1} parent=5 // pred_check
        %p360 = pneg %p359
      $region50: #{tpu_custom_call.1} parent=5 // pred_check_branch
        %362 = sbr.rel (%p360) target = $region52
      $region51: #{tpu_custom_call.1} parent=5 // pred_region
        %s363 = ssub.s32 %s17, 2
        // Predicated region
        $region53: #{tpu_custom_call.1} parent=51 // pred_check
          %p364 = pneg %p130
        $region54: #{tpu_custom_call.1} parent=51 // pred_check_branch
          %366 = sbr.rel (%p364) target = $region56
        $region55: #{tpu_custom_call.1} parent=51 // pred_region
          %s367 = sand.u32 %s115, 1
          %s368 = scalar_lea.sflag [#allocation4], %s367
          %s369 = sand.u32 %s115, 1
          %s370 = smul.addr %s369, 2
          %s371 = scalar_lea.vmem [#allocation9], %s370
          %372 = dma.done %s368, 32
        $region56: #{tpu_custom_call.1} parent=51 // pred_fallthru
          _
      $region52: #{tpu_custom_call.1} parent=5 // pred_fallthru
        _
    $region6: #{tpu_custom_call.1} parent=1 // loop_footer
      %s21 = sadd.s32 1, %s17
    $region7: #{tpu_custom_call.1} parent=1 // loop_footer_branch
      %16 = sbr.rel target = $region3
    $region8: #{tpu_custom_call.1} parent=1 // loop_exit
      _
    %373 = vsyncpa [#allocation3], 1
    %s374 = scalar_lea.sflag [#allocation3], 1
    %375 = vsyncpa %s374, 1
    %376 = vsyncpa [#allocation4], 1
    %s377 = scalar_lea.sflag [#allocation4], 1
    %378 = vsyncpa %s377, 1
    %379 = vsyncpa [#allocation5], 1
    %s380 = scalar_lea.sflag [#allocation5], 1
    %381 = vsyncpa %s380, 1
    %382 = vsyncpa [#allocation6], 1
    %s383 = scalar_lea.sflag [#allocation6], 1
    %384 = vsyncpa %s383, 1

</llo_original>
